<compile_context>
chip_gen: v6e
topology: v6e:2x2x1
jax: 0.10.0
libtpu: 0.0.40
codegen_flags: <defaults>
</compile_context>

<pallas_src>
import functools
import math

import jax
import jax.numpy as jnp
from jax.experimental import pallas as pl
from jax.experimental.pallas import tpu as pltpu

_EPS = 1e-5


def _occupancy_loss_kernel(occ_ref, lab_ref, out_ref, acc_ref, *,
                           rows, tr, sub, cols, n_tiles, n_inner,
                           last_partial, has_ghosts, assume_binary_labels):
    i = pl.program_id(1)

    @pl.when(i == 0)
    def _init():
        acc_ref[...] = jnp.zeros_like(acc_ref)

    # Upcast per-tile inside the kernel (no wrapper-side convert copy).
    occ = occ_ref[...].astype(jnp.float32)
    lab = lab_ref[...].astype(jnp.float32)

    if assume_binary_labels:
        # One log per element instead of two (EUP relief) for 0/1 masks.
        term = -jnp.log(jnp.where(lab > 0.5, occ + _EPS, 1.0 - occ + _EPS))
    else:
        term = -(lab * jnp.log(occ + _EPS)
                 + (1.0 - lab) * jnp.log(1.0 - occ + _EPS))

    def _fold(x):
        # (tr, cols) -> (sub, cols): layout-preserving reshape + sum over the
        # sublane-group axis == pure VPU vreg adds (no XLU, tiny accumulator).
        return x.reshape(tr // sub, sub, cols).sum(axis=0)

    if not (last_partial or has_ghosts):
        # Steady state: no masking, no tile-index arithmetic.
        acc_ref[...] += _fold(term)
    else:
        t = pl.program_id(0) * n_inner + i          # global row-tile index
        if last_partial:
            @pl.when(t < n_tiles - 1)
            def _steady():
                acc_ref[...] += _fold(term)

            @pl.when(t == n_tiles - 1)
            def _last():
                # Only the last valid tile can contain rows past `rows`
                # (garbage from the non-divisible block); mask them here.
                row = (n_tiles - 1) * tr + jax.lax.broadcasted_iota(
                    jnp.int32, (tr, cols), 0)
                acc_ref[...] += _fold(jnp.where(row < rows, term, 0.0))
        else:
            @pl.when(t < n_tiles)                   # skip ghost tiles only
            def _valid():
                acc_ref[...] += _fold(term)

    @pl.when(i == n_inner - 1)
    def _finish():
        out_ref[...] = acc_ref[...][None]


def occupancy_loss(occ_transp, occup_labels_2, weight, *,
                   tile_rows=1024, tile_cols=512, num_slices=2,
                   assume_binary_labels=False):
    """Pallas equivalent of Occupancy_loss.forward (mean BCE * weight)."""
    occ = jnp.asarray(occ_transp)
    lab = jnp.asarray(occup_labels_2)
    if occ.shape != lab.shape:                       # rare; matches torch bcast
        occ, lab = jnp.broadcast_arrays(occ, lab)
    total = occ.size
    if total == 0:
        return jnp.float32(float("nan")) * jnp.float32(weight)

    assert tile_rows % 8 == 0 and tile_cols % 128 == 0

    # --- lane-dense layout without a padded HBM copy (fast path) -----------
    cols = None
    for c in sorted({tile_cols, 512, 256, 128}, reverse=True):
        if c % 128 == 0 and total % c == 0:
            cols = c
            break
    n_flat_pad = 0
    if cols is None:
        # Fallback (rare shapes): tiny flat zero-pad to a lane multiple; the
        # pad contribution is an exact trace-time constant removed below.
        cols = 128
        n_flat_pad = (-total) % cols
        occ = jnp.pad(occ.reshape(-1), (0, n_flat_pad))
        lab = jnp.pad(lab.reshape(-1), (0, n_flat_pad))
    occ2 = occ.reshape(-1, cols)                     # contiguous reshape: free
    lab2 = lab.reshape(-1, cols)
    rows = occ2.shape[0]

    # --- row tiling ---------------------------------------------------------
    tr = rows if rows <= tile_rows else tile_rows    # full-dim block when small
    sub = 8 if tr % 8 == 0 else tr                   # accumulator sublane height
    n_tiles = pl.cdiv(rows, tr)
    last_partial = (rows % tr) != 0

    # --- leading "parallel" axis (both TCs on v7x; no-op on 1-TC chips) -----
    n_slices = max(1, min(num_slices, n_tiles))
    n_inner = pl.cdiv(n_tiles, n_slices)
    has_ghosts = n_slices * n_inner > n_tiles

    def _tile_idx(p, i):
        t = p * n_inner + i
        if has_ghosts:
            t = jnp.minimum(t, n_tiles - 1)          # never DMA a fully-OOB block
        return t

    in_spec = pl.BlockSpec((tr, cols), lambda p, i: (_tile_idx(p, i), 0))
    out_spec = pl.BlockSpec((1, sub, cols), lambda p, i: (p, 0, 0))

    kernel = functools.partial(
        _occupancy_loss_kernel, rows=rows, tr=tr, sub=sub, cols=cols,
        n_tiles=n_tiles, n_inner=n_inner, last_partial=last_partial,
        has_ghosts=has_ghosts, assume_binary_labels=assume_binary_labels)

    cost = pl.CostEstimate(
        flops=8 * total,
        transcendentals=(1 if assume_binary_labels else 2) * total,
        bytes_accessed=total * (occ2.dtype.itemsize + lab2.dtype.itemsize))

    partials = pl.pallas_call(
        kernel,
        out_shape=jax.ShapeDtypeStruct((n_slices, sub, cols), jnp.float32),
        grid_spec=pltpu.PrefetchScalarGridSpec(
            num_scalar_prefetch=0,
            grid=(n_slices, n_inner),
            in_specs=[in_spec, in_spec],
            out_specs=out_spec,
            scratch_shapes=[pltpu.VMEM((sub, cols), jnp.float32)],
        ),
        compiler_params=pltpu.CompilerParams(
            dimension_semantics=("parallel", "arbitrary"),
            vmem_limit_bytes=32 * 1024 * 1024,
        ),
        cost_estimate=cost,
    )(occ2, lab2)

    total_sum = jnp.sum(partials)                    # tiny (P, sub, cols) array
    if n_flat_pad:
        # Each zero-pad element contributed exactly -log1p(eps); remove it.
        total_sum = total_sum + jnp.float32(n_flat_pad * math.log1p(_EPS))

    return (total_sum / jnp.float32(total)) * jnp.float32(weight)


def _occupancy_loss_ref(occ, lab, weight):
    # Pure-JAX reference matching the PyTorch module exactly.
    loss = -(lab * jnp.log(occ + _EPS) + (1.0 - lab) * jnp.log(1.0 - occ + _EPS))
    return jnp.mean(loss) * weight


if __name__ == "__main__":
    key = jax.random.PRNGKey(0)
    k1, k2 = jax.random.split(key)

    B, C, H, W = 2, 4, 16, 16      # small occupancy grid, matches module usage
    weight = 0.5                   # module's self.weight, set deterministically

    occ = jax.nn.sigmoid(jax.random.normal(k1, (B, C, H, W), dtype=jnp.float32))
    labels = (jax.random.uniform(k2, (B, C, H, W)) > 0.5).astype(jnp.float32)

    out = occupancy_loss(occ, labels, weight)
    out = jax.block_until_ready(out)

    ref = _occupancy_loss_ref(occ, labels, weight)
    assert jnp.allclose(out, ref, rtol=1e-5, atol=1e-5), (out, ref)

    print("KERNEL_OK")
</pallas_src>

<mosaic_0001>
module attributes {stable_mosaic.version = 11 : i64} {
  func.func @_occupancy_loss_kernel(%arg0: i32, %arg1: i32, %arg2: memref<4x512xf32, #tpu.memory_space<vmem>>, %arg3: memref<4x512xf32, #tpu.memory_space<vmem>>, %arg4: memref<1x4x512xf32, #tpu.memory_space<vmem>>, %arg5: memref<4x512xf32, #tpu.memory_space<vmem>>) attributes {dimension_semantics = [#tpu.dimension_semantics<parallel>, #tpu.dimension_semantics<arbitrary>], iteration_bounds = array<i64: 1, 1>, scalar_prefetch = 0 : i64, scratch_operands = 1 : i64, tpu.core_type = #tpu.core_type<tc>, window_params = [{transform_indices = @transform_0, window_bounds = array<i64: 4, 512>}, {transform_indices = @transform_1, window_bounds = array<i64: 4, 512>}, {transform_indices = @transform_2, window_bounds = array<i64: 1, 4, 512>}]} {
    %c0_i32 = arith.constant 0 : i32
    %0 = arith.cmpi eq, %arg1, %c0_i32 : i32
    %1 = arith.extui %0 : i1 to i32
    %c0_i32_0 = arith.constant 0 : i32
    %2 = arith.cmpi ne, %1, %c0_i32_0 : i32
    scf.if %2 {
      %cst_15 = arith.constant 0.000000e+00 : f32
      %28 = vector.broadcast %cst_15 : f32 to vector<4x512xf32>
      %c0_16 = arith.constant 0 : index
      %c0_17 = arith.constant 0 : index
      %29 = vector.load %arg5[%c0_16, %c0_17] : memref<4x512xf32, #tpu.memory_space<vmem>>, vector<4x512xf32>
      tpu.vector_store %arg5[%c0_16, %c0_17], %28 {strides = array<i32>} : memref<4x512xf32, #tpu.memory_space<vmem>>, vector<4x512xf32>,
    } else {
    }
    %c0 = arith.constant 0 : index
    %c0_1 = arith.constant 0 : index
    %3 = vector.load %arg2[%c0, %c0_1] : memref<4x512xf32, #tpu.memory_space<vmem>>, vector<4x512xf32>
    %c0_2 = arith.constant 0 : index
    %c0_3 = arith.constant 0 : index
    %4 = vector.load %arg3[%c0_2, %c0_3] : memref<4x512xf32, #tpu.memory_space<vmem>>, vector<4x512xf32>
    %cst = arith.constant 9.99999974E-6 : f32
    %5 = vector.broadcast %cst : f32 to vector<4x512xf32>
    %6 = arith.addf %3, %5 : vector<4x512xf32>
    %7 = math.log %6 : vector<4x512xf32>
    %8 = arith.mulf %4, %7 : vector<4x512xf32>
    %cst_4 = arith.constant 1.000000e+00 : f32
    %9 = vector.broadcast %cst_4 : f32 to vector<4x512xf32>
    %10 = arith.subf %9, %4 : vector<4x512xf32>
    %cst_5 = arith.constant 1.000000e+00 : f32
    %11 = vector.broadcast %cst_5 : f32 to vector<4x512xf32>
    %12 = arith.subf %11, %3 : vector<4x512xf32>
    %cst_6 = arith.constant 9.99999974E-6 : f32
    %13 = vector.broadcast %cst_6 : f32 to vector<4x512xf32>
    %14 = arith.addf %12, %13 : vector<4x512xf32>
    %15 = math.log %14 : vector<4x512xf32>
    %16 = arith.mulf %10, %15 : vector<4x512xf32>
    %17 = arith.addf %8, %16 : vector<4x512xf32>
    %cst_7 = arith.constant 0.000000e+00 : f32
    %18 = vector.broadcast %cst_7 : f32 to vector<4x512xf32>
    %19 = arith.subf %18, %17 : vector<4x512xf32>
    %c0_8 = arith.constant 0 : index
    %c0_9 = arith.constant 0 : index
    %20 = vector.load %arg5[%c0_8, %c0_9] : memref<4x512xf32, #tpu.memory_space<vmem>>, vector<4x512xf32>
    %21 = vector.shape_cast %19 : vector<4x512xf32> to vector<1x4x512xf32>
    %cst_10 = arith.constant dense<0.000000e+00> : vector<4x512xf32>
    %22 = vector.multi_reduction <add>, %21, %cst_10 [0] : vector<1x4x512xf32> to vector<4x512xf32>
    %23 = arith.addf %20, %22 : vector<4x512xf32>
    %c0_11 = arith.constant 0 : index
    %c0_12 = arith.constant 0 : index
    %24 = vector.load %arg5[%c0_11, %c0_12] : memref<4x512xf32, #tpu.memory_space<vmem>>, vector<4x512xf32>
    tpu.vector_store %arg5[%c0_11, %c0_12], %23 {strides = array<i32>} : memref<4x512xf32, #tpu.memory_space<vmem>>, vector<4x512xf32>,
    %c0_i32_13 = arith.constant 0 : i32
    %25 = arith.cmpi eq, %arg1, %c0_i32_13 : i32
    %26 = arith.extui %25 : i1 to i32
    %c0_i32_14 = arith.constant 0 : i32
    %27 = arith.cmpi ne, %26, %c0_i32_14 : i32
    scf.if %27 {
      %c0_15 = arith.constant 0 : index
      %c0_16 = arith.constant 0 : index
      %28 = vector.load %arg5[%c0_15, %c0_16] : memref<4x512xf32, #tpu.memory_space<vmem>>, vector<4x512xf32>
      %29 = vector.shape_cast %28 : vector<4x512xf32> to vector<1x4x512xf32>
      %c0_17 = arith.constant 0 : index
      %c0_18 = arith.constant 0 : index
      %c0_19 = arith.constant 0 : index
      %30 = vector.load %arg4[%c0_17, %c0_18, %c0_19] : memref<1x4x512xf32, #tpu.memory_space<vmem>>, vector<1x4x512xf32>
      tpu.vector_store %arg4[%c0_17, %c0_18, %c0_19], %29 {strides = array<i32>} : memref<1x4x512xf32, #tpu.memory_space<vmem>>, vector<1x4x512xf32>,
    } else {
    }
    return
  }
  func.func @transform_0(%arg0: i32, %arg1: i32) -> (i32, i32) {
    %c1_i32 = arith.constant 1 : i32
    %0 = arith.muli %arg0, %c1_i32 : i32
    %1 = arith.addi %0, %arg1 : i32
    %c0_i32 = arith.constant 0 : i32
    %c0_i32_0 = arith.constant 0 : i32
    return %1, %c0_i32 : i32, i32
  }
  func.func @transform_1(%arg0: i32, %arg1: i32) -> (i32, i32) {
    %c1_i32 = arith.constant 1 : i32
    %0 = arith.muli %arg0, %c1_i32 : i32
    %1 = arith.addi %0, %arg1 : i32
    %c0_i32 = arith.constant 0 : i32
    %c0_i32_0 = arith.constant 0 : i32
    return %1, %c0_i32 : i32, i32
  }
  func.func @transform_2(%arg0: i32, %arg1: i32) -> (i32, i32, i32) {
    %c0_i32 = arith.constant 0 : i32
    %c0_i32_0 = arith.constant 0 : i32
    %c0_i32_1 = arith.constant 0 : i32
    return %arg0, %c0_i32, %c0_i32_0 : i32, i32, i32
  }
}

</mosaic_0001>

<llo_original>
// kernel: tpu_custom_call.1
$region0: #{tpu_custom_call.1}
  #allocation0 [shape = 'u32[]', space=smem, size = 0x4, offset = 0x4, fixed_abs, tag = 'smem constant byte address 0x4 - core index']
  #allocation1 [shape = 'u32[144,128]{1,0:T(1,128)}', space=vmem, size = 0x12000, scoped, tag = 'internal scratch']
  #allocation2 [shape = 'f32[4,512]{1,0:T(4,128)}', space=vmem, size = 0x2000, scoped, tag = 'scratch operand']
  %s0 = inlined_call_operand.hbm [shape: f32[4,512], index: 0, kind: input, shape index: {}]
  %s1 = inlined_call_operand.hbm [shape: f32[4,512], index: 1, kind: input, shape index: {}]
  %s2 = inlined_call_operand.hbm [shape: f32[1,4,512], index: 2, kind: output, shape index: {}]
  %s3 = sld [smem:[#allocation0]]
  $region34: #{tpu_custom_call.1} parent=0
    _
  %s5 = ssub.s32 1, %s3
  %s6 = scalar_select 0, %s5, %s3
  $region1: #{tpu_custom_call.1} parent=0
    #allocation3 [shape = 'u8[8192]{0}', space=vmem, size = 0x2000, scoped, tag = 'input window, operand 0, single buffered']
    #allocation4 [shape = 's32[1]{0}', space=sflag, size = 0x4, scoped, tag = 'scoped memory for tpu_custom_call.1']
    #allocation5 [shape = 's32[1]{0}', space=sflag, size = 0x4, scoped, tag = 'scoped memory for tpu_custom_call.1']
    #allocation6 [shape = 'u8[8192]{0}', space=vmem, size = 0x2000, scoped, tag = 'input window, operand 1, single buffered']
    #allocation7 [shape = 's32[1]{0}', space=sflag, size = 0x4, scoped, tag = 'scoped memory for tpu_custom_call.1']
    #allocation8 [shape = 'u8[8192]{0}', space=vmem, size = 0x2000, scoped, tag = 'output window, operand 0, single buffered']
    %7 = vsyncpa [#allocation4], 0
    %8 = vsyncpa [#allocation7], 0
    %9 = vsyncpa [#allocation5], 0
    // Predicated region
    $region2: #{tpu_custom_call.1} parent=1 // pred_check
      _
    $region3: #{tpu_custom_call.1} parent=1 // pred_check_branch
      %11 = sbr.rel (0) target = $region5
    $region4: #{tpu_custom_call.1} parent=1 // pred_region
      %s12 = sadd.s32 0, 0
      %s14 = ssub.s32 256, 256
      %15 = vsyncadd [#allocation4], %s14
      %s16 = smul.addr %s12, 4
      %s17 = smul.addr %s16, 64
      %s18 = scalar_lea.hbm %s0, %s17
      %s20 = sshll.u32 [#allocation3], 4
      %s21 = int_to_ptr.vmem [resolvable:$true] %s20
      %23 = dma.hbm_to_vmem [thread:$0]  %s18, 256, %s21, [#allocation4]
    $region5: #{tpu_custom_call.1} parent=1 // pred_fallthru
      _
    // Predicated region
    $region6: #{tpu_custom_call.1} parent=1 // pred_check
      _
    $region7: #{tpu_custom_call.1} parent=1 // pred_check_branch
      %25 = sbr.rel (0) target = $region9
    $region8: #{tpu_custom_call.1} parent=1 // pred_region
      %s26 = sadd.s32 0, 0
      %s28 = ssub.s32 256, 256
      %29 = vsyncadd [#allocation7], %s28
      %s30 = smul.addr %s26, 4
      %s31 = smul.addr %s30, 64
      %s32 = scalar_lea.hbm %s1, %s31
      %s34 = sshll.u32 [#allocation6], 4
      %s35 = int_to_ptr.vmem [resolvable:$true] %s34
      %37 = dma.hbm_to_vmem [thread:$0]  %s32, 256, %s35, [#allocation7]
    $region9: #{tpu_custom_call.1} parent=1 // pred_fallthru
      _
    // Predicated region
    $region10: #{tpu_custom_call.1} parent=1 // pred_check
      _
    $region11: #{tpu_custom_call.1} parent=1 // pred_check_branch
      %39 = sbr.rel (0) target = $region13
    $region12: #{tpu_custom_call.1} parent=1 // pred_region
      %40 = dma.done [#allocation4], 256
    $region13: #{tpu_custom_call.1} parent=1 // pred_fallthru
      _
    // Predicated region
    $region14: #{tpu_custom_call.1} parent=1 // pred_check
      _
    $region15: #{tpu_custom_call.1} parent=1 // pred_check_branch
      %42 = sbr.rel (0) target = $region17
    $region16: #{tpu_custom_call.1} parent=1 // pred_region
      %43 = dma.done [#allocation7], 256
    $region17: #{tpu_custom_call.1} parent=1 // pred_fallthru
      _
    %s44 = sadd.s32 0, 0
    %s45 = sadd.s32 0, 0
    %p46 = scmp.eq.s32.totalorder 0, 0
    // Predicated region
    $region18: #{tpu_custom_call.1} parent=1 // pred_check
      %p47 = pneg %p46
    $region19: #{tpu_custom_call.1} parent=1 // pred_check_branch
      %49 = sbr.rel (%p47) target = $region21
    $region20: #{tpu_custom_call.1} parent=1 // pred_region
      %50 = vst [vmem:[#allocation2] sm:$0xff] 0.0
      %51 = vst [vmem:[#allocation2 + $0x8] sm:$0xff] 0.0
    $region21: #{tpu_custom_call.1} parent=1 // pred_fallthru
      _
    %v52 = vld [vmem:[#allocation3] sm:$0xff]
    %v53 = vld [vmem:[#allocation3 + $0x8] sm:$0xff]
    %v54 = vld [vmem:[#allocation6] sm:$0xff]
    %v55 = vld [vmem:[#allocation6 + $0x8] sm:$0xff]
    %v56 = vadd.f32 %v52, 1e-05
    %v57 = vadd.f32 %v53, 1e-05
    %v58 = vlog2.pop %v56
    %v59 = vmul.f32 %v58, 0.6931472
    %v60 = vlog2.pop %v57
    %v61 = vmul.f32 %v60, 0.6931472
    %v62 = vmul.f32 %v54, %v59
    %v63 = vmul.f32 %v55, %v61
    %v64 = vsub.f32 1.0, %v54
    %v65 = vsub.f32 1.0, %v55
    %v66 = vsub.f32 1.0, %v52
    %v67 = vsub.f32 1.0, %v53
    %v68 = vadd.f32 %v66, 1e-05
    %v69 = vadd.f32 %v67, 1e-05
    %v70 = vlog2.pop %v68
    %v71 = vmul.f32 %v70, 0.6931472
    %v72 = vlog2.pop %v69
    %v73 = vmul.f32 %v72, 0.6931472
    %v74 = vmul.f32 %v64, %v71
    %v75 = vmul.f32 %v65, %v73
    %v76 = vadd.f32 %v62, %v74
    %v77 = vadd.f32 %v63, %v75
    %v78 = vsub.f32 0.0, %v76
    %v79 = vsub.f32 0.0, %v77
    %v80 = vld [vmem:[#allocation2] sm:$0xff]
    %v81 = vld [vmem:[#allocation2 + $0x8] sm:$0xff]
    %v82 = vadd.f32 %v78, 0.0
    %v83 = vadd.f32 %v79, 0.0
    %v84 = vadd.f32 %v80, %v82
    %v85 = vadd.f32 %v81, %v83
    %86 = vst [vmem:[#allocation2] sm:$0xff] %v84
    %87 = vst [vmem:[#allocation2 + $0x8] sm:$0xff] %v85
    // Predicated region
    $region22: #{tpu_custom_call.1} parent=1 // pred_check
      %p88 = pneg %p46
    $region23: #{tpu_custom_call.1} parent=1 // pred_check_branch
      %90 = sbr.rel (%p88) target = $region25
    $region24: #{tpu_custom_call.1} parent=1 // pred_region
      %v91 = vld [vmem:[#allocation2] sm:$0xff]
      %v92 = vld [vmem:[#allocation2 + $0x8] sm:$0xff]
      %93 = vst [vmem:[#allocation8] sm:$0xff] %v91
      %94 = vst [vmem:[#allocation8 + $0x8] sm:$0xff] %v92
    $region25: #{tpu_custom_call.1} parent=1 // pred_fallthru
      _
    // Predicated region
    $region26: #{tpu_custom_call.1} parent=1 // pred_check
      _
    $region27: #{tpu_custom_call.1} parent=1 // pred_check_branch
      %96 = sbr.rel (0) target = $region29
    $region28: #{tpu_custom_call.1} parent=1 // pred_region
      %s98 = ssub.s32 256, 256
      %99 = vsyncadd [#allocation5], %s98
      %s101 = sshll.u32 [#allocation8], 4
      %s102 = int_to_ptr.vmem [resolvable:$true] %s101
      %104 = dma.vmem_to_hbm [thread:$0]  %s102, 256, %s2, [#allocation5]
    $region29: #{tpu_custom_call.1} parent=1 // pred_fallthru
      _
    // Predicated region
    $region30: #{tpu_custom_call.1} parent=1 // pred_check
      _
    $region31: #{tpu_custom_call.1} parent=1 // pred_check_branch
      %106 = sbr.rel (0) target = $region33
    $region32: #{tpu_custom_call.1} parent=1 // pred_region
      %107 = dma.done [#allocation5], 256
    $region33: #{tpu_custom_call.1} parent=1 // pred_fallthru
      _
    %108 = vsyncpa [#allocation4], 1
    %109 = vsyncpa [#allocation7], 1
    %110 = vsyncpa [#allocation5], 1

</llo_original>
